<compile_context>
chip_gen: v7x
topology: tpu7x:2x2x1
jax: 0.10.0
libtpu: 0.0.40
codegen_flags: <defaults>
</compile_context>

<pallas_src>
import math
from functools import partial

import jax
import jax.numpy as jnp
from jax.experimental import pallas as pl
from jax.experimental.pallas import tpu as pltpu
from jax.scipy.linalg import block_diag


DEPTH = 4
INPUT_SIZE = 3
HIDDEN_DIM = 32
TOKEN_SIZE = 32


def _cdiv(a, b):
    return -(-a // b)


def _round_up(x, m):
    return ((x + m - 1) // m) * m


def _device_config():
    """Per-chip defaults: point-pack factor, tile cap (packed rows), scoped VMEM,
    and whether the bias+ReLU epilogue runs in bf16."""
    try:
        kind = jax.devices()[0].device_kind.lower()
    except Exception:
        kind = ""
    if ("v7" in kind) or ("7x" in kind) or ("tpu7" in kind):
        # v7x: 64 MiB VMEM/TC, 2 TCs, bf16 VPU -> moderate tiles, bf16 epilogue.
        return dict(pack=8, tile_cap=2048, vmem_bytes=48 * 1024 * 1024, bf16_epilogue=True)
    if "v6" in kind:
        # v6e: 128 MiB VMEM, bf16 VPU -> big tiles, bf16 epilogue.
        return dict(pack=8, tile_cap=4096, vmem_bytes=64 * 1024 * 1024, bf16_epilogue=True)
    if ("v5" in kind) or ("v4" in kind):
        # 128-wide MXU, no bf16 VPU path -> pack 4, f32 epilogue, big tiles.
        return dict(pack=4, tile_cap=4096, vmem_bytes=64 * 1024 * 1024, bf16_epilogue=False)
    if ("v2" in kind) or ("v3" in kind):
        return dict(pack=4, tile_cap=512, vmem_bytes=None, bf16_epilogue=False)
    # Unknown / future chips: conservative VMEM, wide packing.
    return dict(pack=8, tile_cap=2048, vmem_bytes=32 * 1024 * 1024, bf16_epilogue=True)


def _choose_tile_rows(rows, cap):
    """Pick the tile height (multiple of 8, or == rows for a single tile) so that:
      * the grid divides `rows` whenever possible -> no wrapper pad copy / output slice,
      * tiles stay large (>= ~cap/4) to amortize the ~0.35 us/grid-step overhead,
      * the tile count is even when it is small, balancing the two v7x TensorCores."""
    if rows <= cap:
        # One or two tiles cover everything.  Split in half (one tile per core) only when
        # the halves are 8-aligned and large enough to be worth a second pipeline step.
        if rows >= 1024 and rows % 16 == 0:
            return rows // 2
        return rows
    nt_min = _cdiv(rows, cap)
    if rows % 8 == 0:
        # Prefer an exact divisor: zero padding, zero extra HBM copies.
        for nt in range(nt_min, 4 * nt_min + 1):
            if rows % nt == 0 and (rows // nt) % 8 == 0:
                return rows // nt
    # Fallback: round up; wrapper pads at most a few rows per tile.
    nt = nt_min + (nt_min % 2)  # even tile count for the two v7x cores
    return _round_up(_cdiv(rows, nt), 8)


def _mlp_kernel(x_ref, w0_ref, wh_ref, b_ref, o_ref, *, bf16_epilogue):
    # x_ref:  (tile_rows, 3*P) f32        -- P packed points per row
    # w0_ref: (3*P, H*P)       bf16       -- block-diagonal first-layer weight
    # wh_ref: (depth-1, H*P, H*P) bf16    -- block-diagonal remaining weights
    # b_ref:  (depth, 1, H*P)  f32        -- lane-tiled biases
    # o_ref:  (tile_rows, H*P) out dtype (bf16 by default)
    act = jnp.bfloat16
    h = jnp.dot(x_ref[...].astype(act), w0_ref[...],
                preferred_element_type=jnp.float32)
    if bf16_epilogue:
        h = jnp.maximum(h.astype(act) + b_ref[0].astype(act), 0.0)
    else:
        h = jnp.maximum(h + b_ref[0], 0.0)
    for l in range(wh_ref.shape[0]):  # static unroll (depth-1 == 3)
        lhs = h if bf16_epilogue else h.astype(act)
        h = jnp.dot(lhs, wh_ref[l], preferred_element_type=jnp.float32)
        if bf16_epilogue:
            h = jnp.maximum(h.astype(act) + b_ref[l + 1].astype(act), 0.0)
        else:
            h = jnp.maximum(h + b_ref[l + 1], 0.0)
    o_ref[...] = h.astype(o_ref.dtype)


def _pack_params(params, pack):
    """Block-diagonal (point-packed) bf16 weights + lane-tiled f32 biases."""
    w0, _ = params[0]
    hid = w0.shape[1]
    for w, _ in params[1:]:
        # TODO(synk): stacked block-diag weights assume hidden_dim == token_size (true for
        # the module defaults); a non-square final layer would need a separate operand.
        assert w.shape == (hid, hid), "requires hidden_dim == token_size"
    w0_bd = block_diag(*([w0] * pack)).astype(jnp.bfloat16)            # (3P, HP)
    wh_bd = jnp.stack(
        [block_diag(*([w] * pack)) for w, _ in params[1:]]
    ).astype(jnp.bfloat16)                                             # (D-1, HP, HP)
    b_all = jnp.stack(
        [jnp.tile(b.reshape(1, -1), (1, pack)) for _, b in params]
    ).astype(jnp.float32)                                              # (D, 1, HP)
    return w0_bd, wh_bd, b_all


def pointwise_input_offset_mlp(x, params, *, pack=None, tile_rows=None,
                               out_dtype=jnp.bfloat16):
    """x: (..., 3) float32.  params: list of (W, b) with W shaped (in, out).
    Returns (..., token_size) in `out_dtype` (bf16 by default; intermediates are bf16
    anyway, so upcast in the caller only if f32 is truly required)."""
    orig_shape = x.shape
    assert orig_shape[-1] == INPUT_SIZE
    n = math.prod(orig_shape[:-1]) if len(orig_shape) > 1 else 1
    token_size = params[-1][0].shape[1]

    cfg = _device_config()
    if pack is None:
        pack = cfg["pack"]
    tile_cap = tile_rows if tile_rows is not None else cfg["tile_cap"]
    if out_dtype is None:
        out_dtype = x.dtype

    w0_bd, wh_bd, b_all = _pack_params(params, pack)
    lanes = token_size * pack

    # Pack P points per row (contiguous reshape; copy-free when n % pack == 0).
    x2 = x.reshape(n, INPUT_SIZE)
    n_pts_pad = _round_up(n, pack)
    if n_pts_pad != n:
        x2 = jnp.pad(x2, ((0, n_pts_pad - n), (0, 0)))
    rows = n_pts_pad // pack
    xp = x2.reshape(rows, INPUT_SIZE * pack)

    tr = _choose_tile_rows(rows, max(8, tile_cap))
    rows_pad = _round_up(rows, tr)
    if rows_pad != rows:
        # TODO(synk): for very large non-divisible N, run a bulk call on the divisible
        # prefix plus a tiny tail call instead of materializing a padded input copy.
        xp = jnp.pad(xp, ((0, rows_pad - rows), (0, 0)))

    grid = (rows_pad // tr,)
    kernel = partial(_mlp_kernel, bf16_epilogue=cfg["bf16_epilogue"])

    cp_kwargs = dict(dimension_semantics=("parallel",))
    if cfg["vmem_bytes"] is not None:
        cp_kwargs["vmem_limit_bytes"] = cfg["vmem_bytes"]

    out_packed = pl.pallas_call(
        kernel,
        out_shape=jax.ShapeDtypeStruct((rows_pad, lanes), out_dtype),
        grid_spec=pltpu.PrefetchScalarGridSpec(
            num_scalar_prefetch=0,
            grid=grid,
            in_specs=[
                pl.BlockSpec((tr, INPUT_SIZE * pack), lambda i: (i, 0)),
                # Grid-invariant operands: block index never changes, so Pallas keeps
                # them resident in VMEM and does not re-DMA them per step.
                pl.BlockSpec(w0_bd.shape, lambda i: (0, 0)),
                pl.BlockSpec(wh_bd.shape, lambda i: (0, 0, 0)),
                pl.BlockSpec(b_all.shape, lambda i: (0, 0, 0)),
            ],
            out_specs=pl.BlockSpec((tr, lanes), lambda i: (i, 0)),
        ),
        compiler_params=pltpu.CompilerParams(**cp_kwargs),
    )(xp, w0_bd, wh_bd, b_all)

    # Unpack: (rows, token*P) -> (rows*P, token); slice only if padding occurred.
    out = out_packed.reshape(rows_pad * pack, token_size)
    if rows_pad * pack != n:
        out = out[:n]
    return out.reshape(orig_shape[:-1] + (token_size,))


def init_params(key, depth=DEPTH, hidden_dim=HIDDEN_DIM, token_size=TOKEN_SIZE):
    """Xavier-normal weights (as in nn.init.xavier_normal_), zero biases.
    Weights stored as (in_features, out_features) so y = x @ W + b."""
    dims = [INPUT_SIZE] + [hidden_dim] * (depth - 1) + [token_size]
    params = []
    keys = jax.random.split(key, depth)
    for li in range(depth):
        fan_in, fan_out = dims[li], dims[li + 1]
        std = (2.0 / (fan_in + fan_out)) ** 0.5
        w = std * jax.random.normal(keys[li], (fan_in, fan_out), dtype=jnp.float32)
        b = jnp.zeros((1, fan_out), dtype=jnp.float32)
        params.append((w, b))
    return params


def reference_forward(x, params):
    h = x
    for w, b in params:
        h = jnp.maximum(jnp.dot(h, w) + b[0], 0.0)
    return h


if __name__ == "__main__":
    key = jax.random.PRNGKey(0)
    k_param, k_x = jax.random.split(key)

    params = init_params(k_param)

    # Small input: batch=2, 128 points per batch, 3 input coords each.
    x = jax.random.normal(k_x, (2, 128, INPUT_SIZE), dtype=jnp.float32)

    out = pointwise_input_offset_mlp(x, params)
    out = jax.block_until_ready(out)

    ref = reference_forward(x.reshape(-1, INPUT_SIZE), params).reshape(2, 128, TOKEN_SIZE)
    assert out.shape == (2, 128, TOKEN_SIZE), out.shape
    # bf16 MXU operands / bf16 output with f32 accumulation -> relaxed tolerance.
    out_f32 = out.astype(jnp.float32)
    err = float(jnp.max(jnp.abs(out_f32 - ref)))
    assert bool(jnp.allclose(out_f32, ref, atol=3e-2, rtol=3e-2)), err

    print("KERNEL_OK")
</pallas_src>

<mosaic_0001>
module attributes {stable_mosaic.version = 11 : i64} {
  func.func @_mlp_kernel(%arg0: i32, %arg1: memref<32x24xf32, #tpu.memory_space<vmem>>, %arg2: memref<24x256xbf16, #tpu.memory_space<vmem>>, %arg3: memref<3x256x256xbf16, #tpu.memory_space<vmem>>, %arg4: memref<4x1x256xf32, #tpu.memory_space<vmem>>, %arg5: memref<32x256xbf16, #tpu.memory_space<vmem>>) attributes {dimension_semantics = [#tpu.dimension_semantics<parallel>], iteration_bounds = array<i64: 1>, scalar_prefetch = 0 : i64, scratch_operands = 0 : i64, tpu.core_type = #tpu.core_type<tc>, window_params = [{transform_indices = @transform_0, window_bounds = array<i64: 32, 24>}, {pipeline_mode = #tpu.pipeline_mode<synchronous>, transform_indices = @transform_1, window_bounds = array<i64: 24, 256>}, {pipeline_mode = #tpu.pipeline_mode<synchronous>, transform_indices = @transform_2, window_bounds = array<i64: 3, 256, 256>}, {pipeline_mode = #tpu.pipeline_mode<synchronous>, transform_indices = @transform_3, window_bounds = array<i64: 4, 1, 256>}, {transform_indices = @transform_4, window_bounds = array<i64: 32, 256>}]} {
    %c0 = arith.constant 0 : index
    %c0_0 = arith.constant 0 : index
    %0 = vector.load %arg1[%c0, %c0_0] : memref<32x24xf32, #tpu.memory_space<vmem>>, vector<32x24xf32>
    %1 = arith.truncf %0 : vector<32x24xf32> to vector<32x24xbf16>
    %c0_1 = arith.constant 0 : index
    %c0_2 = arith.constant 0 : index
    %2 = vector.load %arg2[%c0_1, %c0_2] : memref<24x256xbf16, #tpu.memory_space<vmem>>, vector<24x256xbf16>
    %cst = arith.constant dense<0.000000e+00> : vector<32x256xf32>
    %3 = tpu.matmul %1, %2, %cst {dimension_numbers = #tpu.dot_dimension_numbers<[1], [0], [0], [1], [0, 0, 1, 1], [], []>} : vector<32x24xbf16>, vector<24x256xbf16>, vector<32x256xf32> -> vector<32x256xf32>
    %4 = arith.truncf %3 : vector<32x256xf32> to vector<32x256xbf16>
    %c0_3 = arith.constant 0 : index
    %c0_4 = arith.constant 0 : index
    %c0_5 = arith.constant 0 : index
    %5 = vector.load %arg4[%c0_3, %c0_4, %c0_5] : memref<4x1x256xf32, #tpu.memory_space<vmem>>, vector<1x1x256xf32>
    %6 = vector.shape_cast %5 : vector<1x1x256xf32> to vector<1x256xf32>
    %7 = arith.truncf %6 : vector<1x256xf32> to vector<1x256xbf16>
    %8 = vector.broadcast %7 : vector<1x256xbf16> to vector<32x256xbf16>
    %9 = arith.addf %4, %8 : vector<32x256xbf16>
    %cst_6 = arith.constant 0.000000e+00 : bf16
    %10 = vector.broadcast %cst_6 : bf16 to vector<32x256xbf16>
    %11 = arith.maximumf %9, %10 : vector<32x256xbf16>
    %c0_7 = arith.constant 0 : index
    %c0_8 = arith.constant 0 : index
    %c0_9 = arith.constant 0 : index
    %12 = vector.load %arg3[%c0_7, %c0_8, %c0_9] : memref<3x256x256xbf16, #tpu.memory_space<vmem>>, vector<1x256x256xbf16>
    %13 = vector.shape_cast %12 : vector<1x256x256xbf16> to vector<256x256xbf16>
    %cst_10 = arith.constant dense<0.000000e+00> : vector<32x256xf32>
    %14 = tpu.matmul %11, %13, %cst_10 {dimension_numbers = #tpu.dot_dimension_numbers<[1], [0], [0], [1], [0, 0, 1, 1], [], []>} : vector<32x256xbf16>, vector<256x256xbf16>, vector<32x256xf32> -> vector<32x256xf32>
    %15 = arith.truncf %14 : vector<32x256xf32> to vector<32x256xbf16>
    %c1 = arith.constant 1 : index
    %c0_11 = arith.constant 0 : index
    %c0_12 = arith.constant 0 : index
    %16 = vector.load %arg4[%c1, %c0_11, %c0_12] : memref<4x1x256xf32, #tpu.memory_space<vmem>>, vector<1x1x256xf32>
    %17 = vector.shape_cast %16 : vector<1x1x256xf32> to vector<1x256xf32>
    %18 = arith.truncf %17 : vector<1x256xf32> to vector<1x256xbf16>
    %19 = vector.broadcast %18 : vector<1x256xbf16> to vector<32x256xbf16>
    %20 = arith.addf %15, %19 : vector<32x256xbf16>
    %cst_13 = arith.constant 0.000000e+00 : bf16
    %21 = vector.broadcast %cst_13 : bf16 to vector<32x256xbf16>
    %22 = arith.maximumf %20, %21 : vector<32x256xbf16>
    %c1_14 = arith.constant 1 : index
    %c0_15 = arith.constant 0 : index
    %c0_16 = arith.constant 0 : index
    %23 = vector.load %arg3[%c1_14, %c0_15, %c0_16] : memref<3x256x256xbf16, #tpu.memory_space<vmem>>, vector<1x256x256xbf16>
    %24 = vector.shape_cast %23 : vector<1x256x256xbf16> to vector<256x256xbf16>
    %cst_17 = arith.constant dense<0.000000e+00> : vector<32x256xf32>
    %25 = tpu.matmul %22, %24, %cst_17 {dimension_numbers = #tpu.dot_dimension_numbers<[1], [0], [0], [1], [0, 0, 1, 1], [], []>} : vector<32x256xbf16>, vector<256x256xbf16>, vector<32x256xf32> -> vector<32x256xf32>
    %26 = arith.truncf %25 : vector<32x256xf32> to vector<32x256xbf16>
    %c2 = arith.constant 2 : index
    %c0_18 = arith.constant 0 : index
    %c0_19 = arith.constant 0 : index
    %27 = vector.load %arg4[%c2, %c0_18, %c0_19] : memref<4x1x256xf32, #tpu.memory_space<vmem>>, vector<1x1x256xf32>
    %28 = vector.shape_cast %27 : vector<1x1x256xf32> to vector<1x256xf32>
    %29 = arith.truncf %28 : vector<1x256xf32> to vector<1x256xbf16>
    %30 = vector.broadcast %29 : vector<1x256xbf16> to vector<32x256xbf16>
    %31 = arith.addf %26, %30 : vector<32x256xbf16>
    %cst_20 = arith.constant 0.000000e+00 : bf16
    %32 = vector.broadcast %cst_20 : bf16 to vector<32x256xbf16>
    %33 = arith.maximumf %31, %32 : vector<32x256xbf16>
    %c2_21 = arith.constant 2 : index
    %c0_22 = arith.constant 0 : index
    %c0_23 = arith.constant 0 : index
    %34 = vector.load %arg3[%c2_21, %c0_22, %c0_23] : memref<3x256x256xbf16, #tpu.memory_space<vmem>>, vector<1x256x256xbf16>
    %35 = vector.shape_cast %34 : vector<1x256x256xbf16> to vector<256x256xbf16>
    %cst_24 = arith.constant dense<0.000000e+00> : vector<32x256xf32>
    %36 = tpu.matmul %33, %35, %cst_24 {dimension_numbers = #tpu.dot_dimension_numbers<[1], [0], [0], [1], [0, 0, 1, 1], [], []>} : vector<32x256xbf16>, vector<256x256xbf16>, vector<32x256xf32> -> vector<32x256xf32>
    %37 = arith.truncf %36 : vector<32x256xf32> to vector<32x256xbf16>
    %c3 = arith.constant 3 : index
    %c0_25 = arith.constant 0 : index
    %c0_26 = arith.constant 0 : index
    %38 = vector.load %arg4[%c3, %c0_25, %c0_26] : memref<4x1x256xf32, #tpu.memory_space<vmem>>, vector<1x1x256xf32>
    %39 = vector.shape_cast %38 : vector<1x1x256xf32> to vector<1x256xf32>
    %40 = arith.truncf %39 : vector<1x256xf32> to vector<1x256xbf16>
    %41 = vector.broadcast %40 : vector<1x256xbf16> to vector<32x256xbf16>
    %42 = arith.addf %37, %41 : vector<32x256xbf16>
    %cst_27 = arith.constant 0.000000e+00 : bf16
    %43 = vector.broadcast %cst_27 : bf16 to vector<32x256xbf16>
    %44 = arith.maximumf %42, %43 : vector<32x256xbf16>
    %c0_28 = arith.constant 0 : index
    %c0_29 = arith.constant 0 : index
    %45 = vector.load %arg5[%c0_28, %c0_29] : memref<32x256xbf16, #tpu.memory_space<vmem>>, vector<32x256xbf16>
    tpu.vector_store %arg5[%c0_28, %c0_29], %44 {strides = array<i32>} : memref<32x256xbf16, #tpu.memory_space<vmem>>, vector<32x256xbf16>,
    return
  }
  func.func @transform_0(%arg0: i32) -> (i32, i32) {
    %c0_i32 = arith.constant 0 : i32
    %c0_i32_0 = arith.constant 0 : i32
    return %arg0, %c0_i32 : i32, i32
  }
  func.func @transform_1(%arg0: i32) -> (i32, i32) {
    %c0_i32 = arith.constant 0 : i32
    %c0_i32_0 = arith.constant 0 : i32
    %c0_i32_1 = arith.constant 0 : i32
    return %c0_i32, %c0_i32_0 : i32, i32
  }
  func.func @transform_2(%arg0: i32) -> (i32, i32, i32) {
    %c0_i32 = arith.constant 0 : i32
    %c0_i32_0 = arith.constant 0 : i32
    %c0_i32_1 = arith.constant 0 : i32
    %c0_i32_2 = arith.constant 0 : i32
    return %c0_i32, %c0_i32_0, %c0_i32_1 : i32, i32, i32
  }
  func.func @transform_3(%arg0: i32) -> (i32, i32, i32) {
    %c0_i32 = arith.constant 0 : i32
    %c0_i32_0 = arith.constant 0 : i32
    %c0_i32_1 = arith.constant 0 : i32
    %c0_i32_2 = arith.constant 0 : i32
    return %c0_i32, %c0_i32_0, %c0_i32_1 : i32, i32, i32
  }
  func.func @transform_4(%arg0: i32) -> (i32, i32) {
    %c0_i32 = arith.constant 0 : i32
    %c0_i32_0 = arith.constant 0 : i32
    return %arg0, %c0_i32 : i32, i32
  }
}

</mosaic_0001>

<llo_original>
// kernel: tpu_custom_call.1
$region0: #{tpu_custom_call.1}
  #allocation0 [shape = 'u32[]', space=smem, size = 0x4, offset = 0x4, fixed_abs, tag = 'smem constant byte address 0x4 - core index']
  #allocation1 [shape = 'u32[144,128]{1,0:T(1,128)}', space=vmem, size = 0x12000, scoped, tag = 'internal scratch']
  %s0 = inlined_call_operand.vmem [shape: f32[32,24], index: 0, kind: input, shape index: {}]
  %s1 = inlined_call_operand.vmem [shape: bf16[24,256], index: 1, kind: input, shape index: {}]
  %s2 = inlined_call_operand.hbm [shape: bf16[3,256,256], index: 2, kind: input, shape index: {}]
  %s3 = inlined_call_operand.vmem [shape: f32[4,1,256], index: 3, kind: input, shape index: {}]
  %s4 = inlined_call_operand.hbm [shape: bf16[32,256], index: 4, kind: output, shape index: {}]
  %s5 = sld [smem:[#allocation0]]
  $region30: #{tpu_custom_call.1} parent=0
    _
  %s7 = ssub.s32 1, %s5
  %s8 = scalar_select 0, %s7, %s5
  $region1: #{tpu_custom_call.1} parent=0
    #allocation2 [shape = 'u8[393216]{0}', space=vmem, size = 0x60000, scoped, tag = 'input window, operand 2, single buffered']
    #allocation3 [shape = 's32[1]{0}', space=sflag, size = 0x4, scoped, tag = 'scoped memory for tpu_custom_call.1']
    #allocation4 [shape = 's32[1]{0}', space=sflag, size = 0x4, scoped, tag = 'scoped memory for tpu_custom_call.1']
    #allocation5 [shape = 'u8[16384]{0}', space=vmem, size = 0x4000, scoped, tag = 'output window, operand 0, single buffered']
    %9 = vsyncpa [#allocation3], 0
    %10 = vsyncpa [#allocation4], 0
    // Predicated region
    $region2: #{tpu_custom_call.1} parent=1 // pred_check
      _
    $region3: #{tpu_custom_call.1} parent=1 // pred_check_branch
      %12 = sbr.rel (0) target = $region5
    $region4: #{tpu_custom_call.1} parent=1 // pred_region
      _
    $region5: #{tpu_custom_call.1} parent=1 // pred_fallthru
      _
    // Predicated region
    $region6: #{tpu_custom_call.1} parent=1 // pred_check
      _
    $region7: #{tpu_custom_call.1} parent=1 // pred_check_branch
      %14 = sbr.rel (0) target = $region9
    $region8: #{tpu_custom_call.1} parent=1 // pred_region
      _
    $region9: #{tpu_custom_call.1} parent=1 // pred_fallthru
      _
    // Predicated region
    $region10: #{tpu_custom_call.1} parent=1 // pred_check
      _
    $region11: #{tpu_custom_call.1} parent=1 // pred_check_branch
      %16 = sbr.rel (0) target = $region13
    $region12: #{tpu_custom_call.1} parent=1 // pred_region
      %s18 = ssub.s32 12288, 12288
      %19 = vsyncadd [#allocation3], %s18
      %s20 = sshll.u32 [#allocation2], 4
      %s21 = int_to_ptr.vmem [resolvable:$true] %s20
      %26 = dma.hbm_to_vmem [thread:$0]  %s2, 12288, %s21, [#allocation3], 128, 128, 8
    $region13: #{tpu_custom_call.1} parent=1 // pred_fallthru
      _
    // Predicated region
    $region14: #{tpu_custom_call.1} parent=1 // pred_check
      _
    $region15: #{tpu_custom_call.1} parent=1 // pred_check_branch
      %28 = sbr.rel (0) target = $region17
    $region16: #{tpu_custom_call.1} parent=1 // pred_region
      _
    $region17: #{tpu_custom_call.1} parent=1 // pred_fallthru
      _
    // Predicated region
    $region18: #{tpu_custom_call.1} parent=1 // pred_check
      _
    $region19: #{tpu_custom_call.1} parent=1 // pred_check_branch
      %30 = sbr.rel (0) target = $region21
    $region20: #{tpu_custom_call.1} parent=1 // pred_region
      %31 = dma.done [#allocation3], 12288
    $region21: #{tpu_custom_call.1} parent=1 // pred_fallthru
      _
    %v33 = vld [vmem:[%s0] sm:$0xff]
    %v34 = vld [vmem:[%s0 + $0x8] sm:$0xff]
    %v35 = vld [vmem:[%s0 + $0x10] sm:$0xff]
    %v36 = vld [vmem:[%s0 + $0x18] sm:$0xff]
    %v37 = vpack.c.bf16 %v34, %v33
    %v38 = vpack.c.bf16 %v36, %v35
    %v39 = vld [vmem:[%s1] sm:$0xff]
    %v40 = vld [vmem:[%s1 + $0x8] sm:$0xff]
    %v41 = vld [vmem:[%s1 + $0x10] sm:$0xff]
    %v45 = vunpack.c.l.b16 %v39
    %v46 = vunpack.c.h.b16 %v39
    %v47 = vunpack.c.l.b16 %v40
    %v48 = vunpack.c.h.b16 %v40
    %v49 = vunpack.c.l.b16 %v41
    %v50 = vunpack.c.h.b16 %v41
    %v51 = vpack.c.b16 %v47, %v45
    %v52 = vpack.c.b16 %v48, %v46
    %v53 = vpack.c.b16 %v49, %v49
    %v54 = vpack.c.b16 %v50, %v50
    %vm57 = vcmask 195584
    %v59 = vsel %vm57, %v37, 0
    %v62 = vsel %vm57, %v38, 0
    %vm64 = vcmask 1043456
    %v66 = vsel %vm64, %v53, 0
    %v69 = vsel %vm64, %v54, 0
    %71 = vmatprep.subr.bf16.mxu0 %v52
    %72 = vmatpush1.bf16.msra.mxu0 %v51
    %73 = vmatprep.subr.bf16.mxu0 %v69
    %74 = vmatpush1.bf16.msra.mxu0 %v66
    %75 = vmatprep.subr.bf16.mxu0 0
    %76 = vmatpush1.bf16.msra.mxu0 0
    %77 = vmatprep.subr.bf16.mxu0 0
    %78 = vmatpush1.bf16.msra.mxu0 0
    %79 = vmatprep.subr.bf16.mxu0 0
    %80 = vmatpush1.bf16.msra.mxu0 0
    %81 = vmatprep.subr.bf16.mxu0 0
    %82 = vmatpush1.bf16.msra.mxu0 0
    %83 = vmatprep.subr.bf16.mxu0 0
    %84 = vmatpush1.bf16.msra.mxu0 0
    %85 = vmatprep.subr.bf16.mxu0 0
    %86 = vmatpush1.bf16.msra.mxu0 0
    %87 = vmatprep.subr.bf16.mxu0 0
    %88 = vmatpush1.bf16.msra.mxu0 0
    %89 = vmatprep.subr.bf16.mxu0 0
    %90 = vmatpush1.bf16.msra.mxu0 0
    %91 = vmatprep.subr.bf16.mxu0 0
    %92 = vmatpush1.bf16.msra.mxu0 0
    %93 = vmatprep.subr.bf16.mxu0 0
    %94 = vmatpush1.bf16.msra.mxu0 0
    %95 = vmatprep.subr.bf16.mxu0 0
    %96 = vmatpush1.bf16.msra.mxu0 0
    %97 = vmatprep.subr.bf16.mxu0 0
    %98 = vmatpush1.bf16.msra.mxu0 0
    %99 = vmatprep.subr.bf16.mxu0 0
    %100 = vmatpush1.bf16.msra.mxu0 0
    %101 = vmatprep.subr.bf16.mxu0 0
    %102 = vmatpush1.bf16.msra.mxu0 0
    %103 = vmatprep.mubr.bf16.mxu0 0
    %104 = vmatmul.mubr.bf16.gmra.mrb[0].mxu0 %v59
    %v105 = vpop.f32.mrb[0].mxu0
    %v106 = vadd.f32 0.0, %v105
    %v107 = vpop.f32.mrb[0].mxu0
    %v108 = vadd.f32 0.0, %v107
    %v109 = vpop.f32.mrb[0].mxu0
    %v110 = vadd.f32 0.0, %v109
    %v111 = vpop.f32.mrb[0].mxu0
    %v112 = vadd.f32 0.0, %v111
    %113 = vmatprep.mubr.bf16.mxu0 0
    %114 = vmatmul.mubr.bf16.gmra.mrb[0].mxu0 %v62
    %v115 = vpop.f32.mrb[0].mxu0
    %v116 = vadd.f32 0.0, %v115
    %v117 = vpop.f32.mrb[0].mxu0
    %v118 = vadd.f32 0.0, %v117
    %v119 = vpop.f32.mrb[0].mxu0
    %v120 = vadd.f32 0.0, %v119
    %v121 = vpop.f32.mrb[0].mxu0
    %v122 = vadd.f32 0.0, %v121
    %123 = vdwg.mxu0
    %v124 = vpack.c.bf16 %v110, %v106
    %v125 = vpack.c.bf16 %v112, %v108
    %v126 = vpack.c.bf16 %v120, %v116
    %v127 = vpack.c.bf16 %v122, %v118
    %v128 = vld [vmem:[%s3] sm:$0x3]
    %v130 = vlaneseq
    %v131 = vshrl.u32 %v130, 7
    %v132 = vsub.s32 0, %v131
    %v133 = vrot.slane %v128, %v132
    %v134 = vlaneseq
    %v135 = vshrl.u32 %v134, 7
    %v136 = vsub.s32 1, %v135
    %v137 = vrot.slane %v128, %v136
    %v140 = vpack.c.bf16 %v133, %v133
    %v141 = vpack.c.bf16 %v137, %v137
    %v143 = vpack.i.b16 %v140, %v140
    %v145 = vlaneseq
    %v146 = vshrl.u32 %v145, 7
    %v147 = vsub.s32 0, %v146
    %v148 = vrot.slane %v143, %v147
    %v150 = vpack.i.b16 %v141, %v141
    %v152 = vlaneseq
    %v153 = vshrl.u32 %v152, 7
    %v154 = vsub.s32 0, %v153
    %v155 = vrot.slane %v150, %v154
    %v156 = vadd.bf16 %v124, %v148
    %v157 = vadd.bf16 %v125, %v155
    %v158 = vadd.bf16 %v126, %v148
    %v159 = vadd.bf16 %v127, %v155
    %v160 = vmax.bf16 %v156, 0
    %v161 = vmax.bf16 %v157, 0
    %v162 = vmax.bf16 %v158, 0
    %v163 = vmax.bf16 %v159, 0
    %v164 = vld [vmem:[#allocation2] sm:$0xff]
    %v165 = vld [vmem:[#allocation2 + $0x8] sm:$0xff]
    %v166 = vld [vmem:[#allocation2 + $0x10] sm:$0xff]
    %v167 = vld [vmem:[#allocation2 + $0x18] sm:$0xff]
    %v168 = vld [vmem:[#allocation2 + $0x20] sm:$0xff]
    %v169 = vld [vmem:[#allocation2 + $0x28] sm:$0xff]
    %v170 = vld [vmem:[#allocation2 + $0x30] sm:$0xff]
    %v171 = vld [vmem:[#allocation2 + $0x38] sm:$0xff]
    %v172 = vld [vmem:[#allocation2 + $0x40] sm:$0xff]
    %v173 = vld [vmem:[#allocation2 + $0x48] sm:$0xff]
    %v174 = vld [vmem:[#allocation2 + $0x50] sm:$0xff]
    %v175 = vld [vmem:[#allocation2 + $0x58] sm:$0xff]
    %v176 = vld [vmem:[#allocation2 + $0x60] sm:$0xff]
    %v177 = vld [vmem:[#allocation2 + $0x68] sm:$0xff]
    %v178 = vld [vmem:[#allocation2 + $0x70] sm:$0xff]
    %v179 = vld [vmem:[#allocation2 + $0x78] sm:$0xff]
    %v180 = vld [vmem:[#allocation2 + $0x80] sm:$0xff]
    %v181 = vld [vmem:[#allocation2 + $0x88] sm:$0xff]
    %v182 = vld [vmem:[#allocation2 + $0x90] sm:$0xff]
    %v183 = vld [vmem:[#allocation2 + $0x98] sm:$0xff]
    %v184 = vld [vmem:[#allocation2 + $0xa0] sm:$0xff]
    %v185 = vld [vmem:[#allocation2 + $0xa8] sm:$0xff]
    %v186 = vld [vmem:[#allocation2 + $0xb0] sm:$0xff]
    %v187 = vld [vmem:[#allocation2 + $0xb8] sm:$0xff]
    %v188 = vld [vmem:[#allocation2 + $0xc0] sm:$0xff]
    %v189 = vld [vmem:[#allocation2 + $0xc8] sm:$0xff]
    %v190 = vld [vmem:[#allocation2 + $0xd0] sm:$0xff]
    %v191 = vld [vmem:[#allocation2 + $0xd8] sm:$0xff]
    %v192 = vld [vmem:[#allocation2 + $0xe0] sm:$0xff]
    %v193 = vld [vmem:[#allocation2 + $0xe8] sm:$0xff]
    %v194 = vld [vmem:[#allocation2 + $0xf0] sm:$0xff]
    %v195 = vld [vmem:[#allocation2 + $0xf8] sm:$0xff]
    %v228 = vunpack.c.l.b16 %v164
    %v229 = vunpack.c.h.b16 %v164
    %v230 = vunpack.c.l.b16 %v165
    %v231 = vunpack.c.h.b16 %v165
    %v232 = vunpack.c.l.b16 %v166
    %v233 = vunpack.c.h.b16 %v166
    %v234 = vunpack.c.l.b16 %v167
    %v235 = vunpack.c.h.b16 %v167
    %v236 = vunpack.c.l.b16 %v168
    %v237 = vunpack.c.h.b16 %v168
    %v238 = vunpack.c.l.b16 %v169
    %v239 = vunpack.c.h.b16 %v169
    %v240 = vunpack.c.l.b16 %v170
    %v241 = vunpack.c.h.b16 %v170
    %v242 = vunpack.c.l.b16 %v171
    %v243 = vunpack.c.h.b16 %v171
    %v244 = vunpack.c.l.b16 %v172
    %v245 = vunpack.c.h.b16 %v172
    %v246 = vunpack.c.l.b16 %v173
    %v247 = vunpack.c.h.b16 %v173
    %v248 = vunpack.c.l.b16 %v174
    %v249 = vunpack.c.h.b16 %v174
    %v250 = vunpack.c.l.b16 %v175
    %v251 = vunpack.c.h.b16 %v175
    %v252 = vunpack.c.l.b16 %v176
    %v253 = vunpack.c.h.b16 %v176
    %v254 = vunpack.c.l.b16 %v177
    %v255 = vunpack.c.h.b16 %v177
    %v256 = vunpack.c.l.b16 %v178
    %v257 = vunpack.c.h.b16 %v178
    %v258 = vunpack.c.l.b16 %v179
    %v259 = vunpack.c.h.b16 %v179
    %v260 = vunpack.c.l.b16 %v180
    %v261 = vunpack.c.h.b16 %v180
    %v262 = vunpack.c.l.b16 %v181
    %v263 = vunpack.c.h.b16 %v181
    %v264 = vunpack.c.l.b16 %v182
    %v265 = vunpack.c.h.b16 %v182
    %v266 = vunpack.c.l.b16 %v183
    %v267 = vunpack.c.h.b16 %v183
    %v268 = vunpack.c.l.b16 %v184
    %v269 = vunpack.c.h.b16 %v184
    %v270 = vunpack.c.l.b16 %v185
    %v271 = vunpack.c.h.b16 %v185
    %v272 = vunpack.c.l.b16 %v186
    %v273 = vunpack.c.h.b16 %v186
    %v274 = vunpack.c.l.b16 %v187
    %v275 = vunpack.c.h.b16 %v187
    %v276 = vunpack.c.l.b16 %v188
    %v277 = vunpack.c.h.b16 %v188
    %v278 = vunpack.c.l.b16 %v189
    %v279 = vunpack.c.h.b16 %v189
    %v280 = vunpack.c.l.b16 %v190
    %v281 = vunpack.c.h.b16 %v190
    %v282 = vunpack.c.l.b16 %v191
    %v283 = vunpack.c.h.b16 %v191
    %v284 = vunpack.c.l.b16 %v192
    %v285 = vunpack.c.h.b16 %v192
    %v286 = vunpack.c.l.b16 %v193
    %v287 = vunpack.c.h.b16 %v193
    %v288 = vunpack.c.l.b16 %v194
    %v289 = vunpack.c.h.b16 %v194
    %v290 = vunpack.c.l.b16 %v195
    %v291 = vunpack.c.h.b16 %v195
    %v292 = vpack.c.b16 %v230, %v228
    %v293 = vpack.c.b16 %v231, %v229
    %v294 = vpack.c.b16 %v234, %v232
    %v295 = vpack.c.b16 %v235, %v233
    %v296 = vpack.c.b16 %v238, %v236
    %v297 = vpack.c.b16 %v239, %v237
    %v298 = vpack.c.b16 %v242, %v240
    %v299 = vpack.c.b16 %v243, %v241
    %v300 = vpack.c.b16 %v246, %v244
    %v301 = vpack.c.b16 %v247, %v245
    %v302 = vpack.c.b16 %v250, %v248
    %v303 = vpack.c.b16 %v251, %v249
    %v304 = vpack.c.b16 %v254, %v252
    %v305 = vpack.c.b16 %v255, %v253
    %v306 = vpack.c.b16 %v258, %v256
    %v307 = vpack.c.b16 %v259, %v257
    %v308 = vpack.c.b16 %v262, %v260
    %v309 = vpack.c.b16 %v263, %v261
    %v310 = vpack.c.b16 %v266, %v264
    %v311 = vpack.c.b16 %v267, %v265
    %v312 = vpack.c.b16 %v270, %v268
    %v313 = vpack.c.b16 %v271, %v269
    %v314 = vpack.c.b16 %v274, %v272
    %v315 = vpack.c.b16 %v275, %v273
    %v316 = vpack.c.b16 %v278, %v276
    %v317 = vpack.c.b16 %v279, %v277
    %v318 = vpack.c.b16 %v282, %v280
    %v319 = vpack.c.b16 %v283, %v281
    %v320 = vpack.c.b16 %v286, %v284
    %v321 = vpack.c.b16 %v287, %v285
    %v322 = vpack.c.b16 %v290, %v288
    %v323 = vpack.c.b16 %v291, %v289
    %356 = vmatprep.subr.bf16.mxu0 %v293
    %357 = vmatpush1.bf16.msra.mxu0 %v292
    %358 = vmatprep.subr.bf16.mxu0 %v295
    %359 = vmatpush1.bf16.msra.mxu0 %v294
    %360 = vmatprep.subr.bf16.mxu0 %v297
    %361 = vmatpush1.bf16.msra.mxu0 %v296
    %362 = vmatprep.subr.bf16.mxu0 %v299
    %363 = vmatpush1.bf16.msra.mxu0 %v298
    %364 = vmatprep.subr.bf16.mxu0 %v301
    %365 = vmatpush1.bf16.msra.mxu0 %v300
    %366 = vmatprep.subr.bf16.mxu0 %v303
    %367 = vmatpush1.bf16.msra.mxu0 %v302
    %368 = vmatprep.subr.bf16.mxu0 %v305
    %369 = vmatpush1.bf16.msra.mxu0 %v304
    %370 = vmatprep.subr.bf16.mxu0 %v307
    %371 = vmatpush1.bf16.msra.mxu0 %v306
    %372 = vmatprep.subr.bf16.mxu0 %v309
    %373 = vmatpush1.bf16.msra.mxu0 %v308
    %374 = vmatprep.subr.bf16.mxu0 %v311
    %375 = vmatpush1.bf16.msra.mxu0 %v310
    %376 = vmatprep.subr.bf16.mxu0 %v313
    %377 = vmatpush1.bf16.msra.mxu0 %v312
    %378 = vmatprep.subr.bf16.mxu0 %v315
    %379 = vmatpush1.bf16.msra.mxu0 %v314
    %380 = vmatprep.subr.bf16.mxu0 %v317
    %381 = vmatpush1.bf16.msra.mxu0 %v316
    %382 = vmatprep.subr.bf16.mxu0 %v319
    %383 = vmatpush1.bf16.msra.mxu0 %v318
    %384 = vmatprep.subr.bf16.mxu0 %v321
    %385 = vmatpush1.bf16.msra.mxu0 %v320
    %386 = vmatprep.subr.bf16.mxu0 %v323
    %387 = vmatpush1.bf16.msra.mxu0 %v322
    %388 = vmatprep.mubr.bf16.mxu0 %v161
    %389 = vmatmul.mubr.bf16.gmra.mrb[0].mxu0 %v160
    %v390 = vpop.f32.mrb[0].mxu0
    %v391 = vadd.f32 0.0, %v390
    %v392 = vpop.f32.mrb[0].mxu0
    %v393 = vadd.f32 0.0, %v392
    %v394 = vpop.f32.mrb[0].mxu0
    %v395 = vadd.f32 0.0, %v394
    %v396 = vpop.f32.mrb[0].mxu0
    %v397 = vadd.f32 0.0, %v396
    %398 = vmatprep.mubr.bf16.mxu0 %v163
    %399 = vmatmul.mubr.bf16.gmra.mrb[0].mxu0 %v162
    %v400 = vpop.f32.mrb[0].mxu0
    %v401 = vadd.f32 0.0, %v400
    %v402 = vpop.f32.mrb[0].mxu0
    %v403 = vadd.f32 0.0, %v402
    %v404 = vpop.f32.mrb[0].mxu0
    %v405 = vadd.f32 0.0, %v404
    %v406 = vpop.f32.mrb[0].mxu0
    %v407 = vadd.f32 0.0, %v406
    %408 = vdwg.mxu0
    %v409 = vpack.c.bf16 %v395, %v391
    %v410 = vpack.c.bf16 %v397, %v393
    %v411 = vpack.c.bf16 %v405, %v401
    %v412 = vpack.c.bf16 %v407, %v403
    %s413 = scalar_lea.vmem %s3, 2
    %v414 = vld [vmem:[%s413] sm:$0x3]
    %v416 = vlaneseq
    %v417 = vshrl.u32 %v416, 7
    %v418 = vsub.s32 0, %v417
    %v419 = vrot.slane %v414, %v418
    %v420 = vlaneseq
    %v421 = vshrl.u32 %v420, 7
    %v422 = vsub.s32 1, %v421
    %v423 = vrot.slane %v414, %v422
    %v426 = vpack.c.bf16 %v419, %v419
    %v427 = vpack.c.bf16 %v423, %v423
    %v429 = vpack.i.b16 %v426, %v426
    %v431 = vlaneseq
    %v432 = vshrl.u32 %v431, 7
    %v433 = vsub.s32 0, %v432
    %v434 = vrot.slane %v429, %v433
    %v436 = vpack.i.b16 %v427, %v427
    %v438 = vlaneseq
    %v439 = vshrl.u32 %v438, 7
    %v440 = vsub.s32 0, %v439
    %v441 = vrot.slane %v436, %v440
    %v442 = vadd.bf16 %v409, %v434
    %v443 = vadd.bf16 %v410, %v441
    %v444 = vadd.bf16 %v411, %v434
    %v445 = vadd.bf16 %v412, %v441
    %v446 = vmax.bf16 %v442, 0
    %v447 = vmax.bf16 %v443, 0
    %v448 = vmax.bf16 %v444, 0
    %v449 = vmax.bf16 %v445, 0
    %s450 = scalar_lea.vmem [#allocation2], 256
    %v451 = vld [vmem:[%s450] sm:$0xff]
    %v452 = vld [vmem:[%s450 + $0x8] sm:$0xff]
    %v453 = vld [vmem:[%s450 + $0x10] sm:$0xff]
    %v454 = vld [vmem:[%s450 + $0x18] sm:$0xff]
    %v455 = vld [vmem:[%s450 + $0x20] sm:$0xff]
    %v456 = vld [vmem:[%s450 + $0x28] sm:$0xff]
    %v457 = vld [vmem:[%s450 + $0x30] sm:$0xff]
    %v458 = vld [vmem:[%s450 + $0x38] sm:$0xff]
    %v459 = vld [vmem:[%s450 + $0x40] sm:$0xff]
    %v460 = vld [vmem:[%s450 + $0x48] sm:$0xff]
    %v461 = vld [vmem:[%s450 + $0x50] sm:$0xff]
    %v462 = vld [vmem:[%s450 + $0x58] sm:$0xff]
    %v463 = vld [vmem:[%s450 + $0x60] sm:$0xff]
    %v464 = vld [vmem:[%s450 + $0x68] sm:$0xff]
    %v465 = vld [vmem:[%s450 + $0x70] sm:$0xff]
    %v466 = vld [vmem:[%s450 + $0x78] sm:$0xff]
    %v467 = vld [vmem:[%s450 + $0x80] sm:$0xff]
    %v468 = vld [vmem:[%s450 + $0x88] sm:$0xff]
    %v469 = vld [vmem:[%s450 + $0x90] sm:$0xff]
    %v470 = vld [vmem:[%s450 + $0x98] sm:$0xff]
    %v471 = vld [vmem:[%s450 + $0xa0] sm:$0xff]
    %v472 = vld [vmem:[%s450 + $0xa8] sm:$0xff]
    %v473 = vld [vmem:[%s450 + $0xb0] sm:$0xff]
    %v474 = vld [vmem:[%s450 + $0xb8] sm:$0xff]
    %v475 = vld [vmem:[%s450 + $0xc0] sm:$0xff]
    %v476 = vld [vmem:[%s450 + $0xc8] sm:$0xff]
    %v477 = vld [vmem:[%s450 + $0xd0] sm:$0xff]
    %v478 = vld [vmem:[%s450 + $0xd8] sm:$0xff]
    %v479 = vld [vmem:[%s450 + $0xe0] sm:$0xff]
    %v480 = vld [vmem:[%s450 + $0xe8] sm:$0xff]
    %v481 = vld [vmem:[%s450 + $0xf0] sm:$0xff]
    %v482 = vld [vmem:[%s450 + $0xf8] sm:$0xff]
    %v515 = vunpack.c.l.b16 %v451
    %v516 = vunpack.c.h.b16 %v451
    %v517 = vunpack.c.l.b16 %v452
    %v518 = vunpack.c.h.b16 %v452
    %v519 = vunpack.c.l.b16 %v453
    %v520 = vunpack.c.h.b16 %v453
    %v521 = vunpack.c.l.b16 %v454
    %v522 = vunpack.c.h.b16 %v454
    %v523 = vunpack.c.l.b16 %v455
    %v524 = vunpack.c.h.b16 %v455
    %v525 = vunpack.c.l.b16 %v456
    %v526 = vunpack.c.h.b16 %v456
    %v527 = vunpack.c.l.b16 %v457
    %v528 = vunpack.c.h.b16 %v457
    %v529 = vunpack.c.l.b16 %v458
    %v530 = vunpack.c.h.b16 %v458
    %v531 = vunpack.c.l.b16 %v459
    %v532 = vunpack.c.h.b16 %v459
    %v533 = vunpack.c.l.b16 %v460
    %v534 = vunpack.c.h.b16 %v460
    %v535 = vunpack.c.l.b16 %v461
    %v536 = vunpack.c.h.b16 %v461
    %v537 = vunpack.c.l.b16 %v462
    %v538 = vunpack.c.h.b16 %v462
    %v539 = vunpack.c.l.b16 %v463
    %v540 = vunpack.c.h.b16 %v463
    %v541 = vunpack.c.l.b16 %v464
    %v542 = vunpack.c.h.b16 %v464
    %v543 = vunpack.c.l.b16 %v465
    %v544 = vunpack.c.h.b16 %v465
    %v545 = vunpack.c.l.b16 %v466
    %v546 = vunpack.c.h.b16 %v466
    %v547 = vunpack.c.l.b16 %v467
    %v548 = vunpack.c.h.b16 %v467
    %v549 = vunpack.c.l.b16 %v468
    %v550 = vunpack.c.h.b16 %v468
    %v551 = vunpack.c.l.b16 %v469
    %v552 = vunpack.c.h.b16 %v469
    %v553 = vunpack.c.l.b16 %v470
    %v554 = vunpack.c.h.b16 %v470
    %v555 = vunpack.c.l.b16 %v471
    %v556 = vunpack.c.h.b16 %v471
    %v557 = vunpack.c.l.b16 %v472
    %v558 = vunpack.c.h.b16 %v472
    %v559 = vunpack.c.l.b16 %v473
    %v560 = vunpack.c.h.b16 %v473
    %v561 = vunpack.c.l.b16 %v474
    %v562 = vunpack.c.h.b16 %v474
    %v563 = vunpack.c.l.b16 %v475
    %v564 = vunpack.c.h.b16 %v475
    %v565 = vunpack.c.l.b16 %v476
    %v566 = vunpack.c.h.b16 %v476
    %v567 = vunpack.c.l.b16 %v477
    %v568 = vunpack.c.h.b16 %v477
    %v569 = vunpack.c.l.b16 %v478
    %v570 = vunpack.c.h.b16 %v478
    %v571 = vunpack.c.l.b16 %v479
    %v572 = vunpack.c.h.b16 %v479
    %v573 = vunpack.c.l.b16 %v480
    %v574 = vunpack.c.h.b16 %v480
    %v575 = vunpack.c.l.b16 %v481
    %v576 = vunpack.c.h.b16 %v481
    %v577 = vunpack.c.l.b16 %v482
    %v578 = vunpack.c.h.b16 %v482
    %v579 = vpack.c.b16 %v517, %v515
    %v580 = vpack.c.b16 %v518, %v516
    %v581 = vpack.c.b16 %v521, %v519
    %v582 = vpack.c.b16 %v522, %v520
    %v583 = vpack.c.b16 %v525, %v523
    %v584 = vpack.c.b16 %v526, %v524
    %v585 = vpack.c.b16 %v529, %v527
    %v586 = vpack.c.b16 %v530, %v528
    %v587 = vpack.c.b16 %v533, %v531
    %v588 = vpack.c.b16 %v534, %v532
    %v589 = vpack.c.b16 %v537, %v535
    %v590 = vpack.c.b16 %v538, %v536
    %v591 = vpack.c.b16 %v541, %v539
    %v592 = vpack.c.b16 %v542, %v540
    %v593 = vpack.c.b16 %v545, %v543
    %v594 = vpack.c.b16 %v546, %v544
    %v595 = vpack.c.b16 %v549, %v547
    %v596 = vpack.c.b16 %v550, %v548
    %v597 = vpack.c.b16 %v553, %v551
    %v598 = vpack.c.b16 %v554, %v552
    %v599 = vpack.c.b16 %v557, %v555
    %v600 = vpack.c.b16 %v558, %v556
    %v601 = vpack.c.b16 %v561, %v559
    %v602 = vpack.c.b16 %v562, %v560
    %v603 = vpack.c.b16 %v565, %v563
    %v604 = vpack.c.b16 %v566, %v564
    %v605 = vpack.c.b16 %v569, %v567
    %v606 = vpack.c.b16 %v570, %v568
    %v607 = vpack.c.b16 %v573, %v571
    %v608 = vpack.c.b16 %v574, %v572
    %v609 = vpack.c.b16 %v577, %v575
    %v610 = vpack.c.b16 %v578, %v576
    %643 = vmatprep.subr.bf16.mxu0 %v580
    %644 = vmatpush1.bf16.msra.mxu0 %v579
    %645 = vmatprep.subr.bf16.mxu0 %v582
    %646 = vmatpush1.bf16.msra.mxu0 %v581
    %647 = vmatprep.subr.bf16.mxu0 %v584
    %648 = vmatpush1.bf16.msra.mxu0 %v583
    %649 = vmatprep.subr.bf16.mxu0 %v586
    %650 = vmatpush1.bf16.msra.mxu0 %v585
    %651 = vmatprep.subr.bf16.mxu0 %v588
    %652 = vmatpush1.bf16.msra.mxu0 %v587
    %653 = vmatprep.subr.bf16.mxu0 %v590
    %654 = vmatpush1.bf16.msra.mxu0 %v589
    %655 = vmatprep.subr.bf16.mxu0 %v592
    %656 = vmatpush1.bf16.msra.mxu0 %v591
    %657 = vmatprep.subr.bf16.mxu0 %v594
    %658 = vmatpush1.bf16.msra.mxu0 %v593
    %659 = vmatprep.subr.bf16.mxu0 %v596
    %660 = vmatpush1.bf16.msra.mxu0 %v595
    %661 = vmatprep.subr.bf16.mxu0 %v598
    %662 = vmatpush1.bf16.msra.mxu0 %v597
    %663 = vmatprep.subr.bf16.mxu0 %v600
    %664 = vmatpush1.bf16.msra.mxu0 %v599
    %665 = vmatprep.subr.bf16.mxu0 %v602
    %666 = vmatpush1.bf16.msra.mxu0 %v601
    %667 = vmatprep.subr.bf16.mxu0 %v604
    %668 = vmatpush1.bf16.msra.mxu0 %v603
    %669 = vmatprep.subr.bf16.mxu0 %v606
    %670 = vmatpush1.bf16.msra.mxu0 %v605
    %671 = vmatprep.subr.bf16.mxu0 %v608
    %672 = vmatpush1.bf16.msra.mxu0 %v607
    %673 = vmatprep.subr.bf16.mxu0 %v610
    %674 = vmatpush1.bf16.msra.mxu0 %v609
    %675 = vmatprep.mubr.bf16.mxu0 %v447
    %676 = vmatmul.mubr.bf16.gmra.mrb[0].mxu0 %v446
    %v677 = vpop.f32.mrb[0].mxu0
    %v678 = vadd.f32 0.0, %v677
    %v679 = vpop.f32.mrb[0].mxu0
    %v680 = vadd.f32 0.0, %v679
    %v681 = vpop.f32.mrb[0].mxu0
    %v682 = vadd.f32 0.0, %v681
    %v683 = vpop.f32.mrb[0].mxu0
    %v684 = vadd.f32 0.0, %v683
    %685 = vmatprep.mubr.bf16.mxu0 %v449
    %686 = vmatmul.mubr.bf16.gmra.mrb[0].mxu0 %v448
    %v687 = vpop.f32.mrb[0].mxu0
    %v688 = vadd.f32 0.0, %v687
    %v689 = vpop.f32.mrb[0].mxu0
    %v690 = vadd.f32 0.0, %v689
    %v691 = vpop.f32.mrb[0].mxu0
    %v692 = vadd.f32 0.0, %v691
    %v693 = vpop.f32.mrb[0].mxu0
    %v694 = vadd.f32 0.0, %v693
    %695 = vdwg.mxu0
    %v696 = vpack.c.bf16 %v682, %v678
    %v697 = vpack.c.bf16 %v684, %v680
    %v698 = vpack.c.bf16 %v692, %v688
    %v699 = vpack.c.bf16 %v694, %v690
    %s700 = scalar_lea.vmem %s3, 4
    %v701 = vld [vmem:[%s700] sm:$0x3]
    %v703 = vlaneseq
    %v704 = vshrl.u32 %v703, 7
    %v705 = vsub.s32 0, %v704
    %v706 = vrot.slane %v701, %v705
    %v707 = vlaneseq
    %v708 = vshrl.u32 %v707, 7
    %v709 = vsub.s32 1, %v708
    %v710 = vrot.slane %v701, %v709
    %v713 = vpack.c.bf16 %v706, %v706
    %v714 = vpack.c.bf16 %v710, %v710
    %v716 = vpack.i.b16 %v713, %v713
    %v718 = vlaneseq
    %v719 = vshrl.u32 %v718, 7
    %v720 = vsub.s32 0, %v719
    %v721 = vrot.slane %v716, %v720
    %v723 = vpack.i.b16 %v714, %v714
    %v725 = vlaneseq
    %v726 = vshrl.u32 %v725, 7
    %v727 = vsub.s32 0, %v726
    %v728 = vrot.slane %v723, %v727
    %v729 = vadd.bf16 %v696, %v721
    %v730 = vadd.bf16 %v697, %v728
    %v731 = vadd.bf16 %v698, %v721
    %v732 = vadd.bf16 %v699, %v728
    %v733 = vmax.bf16 %v729, 0
    %v734 = vmax.bf16 %v730, 0
    %v735 = vmax.bf16 %v731, 0
    %v736 = vmax.bf16 %v732, 0
    %s737 = scalar_lea.vmem [#allocation2], 512
    %v738 = vld [vmem:[%s737] sm:$0xff]
    %v739 = vld [vmem:[%s737 + $0x8] sm:$0xff]
    %v740 = vld [vmem:[%s737 + $0x10] sm:$0xff]
    %v741 = vld [vmem:[%s737 + $0x18] sm:$0xff]
    %v742 = vld [vmem:[%s737 + $0x20] sm:$0xff]
    %v743 = vld [vmem:[%s737 + $0x28] sm:$0xff]
    %v744 = vld [vmem:[%s737 + $0x30] sm:$0xff]
    %v745 = vld [vmem:[%s737 + $0x38] sm:$0xff]
    %v746 = vld [vmem:[%s737 + $0x40] sm:$0xff]
    %v747 = vld [vmem:[%s737 + $0x48] sm:$0xff]
    %v748 = vld [vmem:[%s737 + $0x50] sm:$0xff]
    %v749 = vld [vmem:[%s737 + $0x58] sm:$0xff]
    %v750 = vld [vmem:[%s737 + $0x60] sm:$0xff]
    %v751 = vld [vmem:[%s737 + $0x68] sm:$0xff]
    %v752 = vld [vmem:[%s737 + $0x70] sm:$0xff]
    %v753 = vld [vmem:[%s737 + $0x78] sm:$0xff]
    %v754 = vld [vmem:[%s737 + $0x80] sm:$0xff]
    %v755 = vld [vmem:[%s737 + $0x88] sm:$0xff]
    %v756 = vld [vmem:[%s737 + $0x90] sm:$0xff]
    %v757 = vld [vmem:[%s737 + $0x98] sm:$0xff]
    %v758 = vld [vmem:[%s737 + $0xa0] sm:$0xff]
    %v759 = vld [vmem:[%s737 + $0xa8] sm:$0xff]
    %v760 = vld [vmem:[%s737 + $0xb0] sm:$0xff]
    %v761 = vld [vmem:[%s737 + $0xb8] sm:$0xff]
    %v762 = vld [vmem:[%s737 + $0xc0] sm:$0xff]
    %v763 = vld [vmem:[%s737 + $0xc8] sm:$0xff]
    %v764 = vld [vmem:[%s737 + $0xd0] sm:$0xff]
    %v765 = vld [vmem:[%s737 + $0xd8] sm:$0xff]
    %v766 = vld [vmem:[%s737 + $0xe0] sm:$0xff]
    %v767 = vld [vmem:[%s737 + $0xe8] sm:$0xff]
    %v768 = vld [vmem:[%s737 + $0xf0] sm:$0xff]
    %v769 = vld [vmem:[%s737 + $0xf8] sm:$0xff]
    %v802 = vunpack.c.l.b16 %v738
    %v803 = vunpack.c.h.b16 %v738
    %v804 = vunpack.c.l.b16 %v739
    %v805 = vunpack.c.h.b16 %v739
    %v806 = vunpack.c.l.b16 %v740
    %v807 = vunpack.c.h.b16 %v740
    %v808 = vunpack.c.l.b16 %v741
    %v809 = vunpack.c.h.b16 %v741
    %v810 = vunpack.c.l.b16 %v742
    %v811 = vunpack.c.h.b16 %v742
    %v812 = vunpack.c.l.b16 %v743
    %v813 = vunpack.c.h.b16 %v743
    %v814 = vunpack.c.l.b16 %v744
    %v815 = vunpack.c.h.b16 %v744
    %v816 = vunpack.c.l.b16 %v745
    %v817 = vunpack.c.h.b16 %v745
    %v818 = vunpack.c.l.b16 %v746
    %v819 = vunpack.c.h.b16 %v746
    %v820 = vunpack.c.l.b16 %v747
    %v821 = vunpack.c.h.b16 %v747
    %v822 = vunpack.c.l.b16 %v748
    %v823 = vunpack.c.h.b16 %v748
    %v824 = vunpack.c.l.b16 %v749
    %v825 = vunpack.c.h.b16 %v749
    %v826 = vunpack.c.l.b16 %v750
    %v827 = vunpack.c.h.b16 %v750
    %v828 = vunpack.c.l.b16 %v751
    %v829 = vunpack.c.h.b16 %v751
    %v830 = vunpack.c.l.b16 %v752
    %v831 = vunpack.c.h.b16 %v752
    %v832 = vunpack.c.l.b16 %v753
    %v833 = vunpack.c.h.b16 %v753
    %v834 = vunpack.c.l.b16 %v754
    %v835 = vunpack.c.h.b16 %v754
    %v836 = vunpack.c.l.b16 %v755
    %v837 = vunpack.c.h.b16 %v755
    %v838 = vunpack.c.l.b16 %v756
    %v839 = vunpack.c.h.b16 %v756
    %v840 = vunpack.c.l.b16 %v757
    %v841 = vunpack.c.h.b16 %v757
    %v842 = vunpack.c.l.b16 %v758
    %v843 = vunpack.c.h.b16 %v758
    %v844 = vunpack.c.l.b16 %v759
    %v845 = vunpack.c.h.b16 %v759
    %v846 = vunpack.c.l.b16 %v760
    %v847 = vunpack.c.h.b16 %v760
    %v848 = vunpack.c.l.b16 %v761
    %v849 = vunpack.c.h.b16 %v761
    %v850 = vunpack.c.l.b16 %v762
    %v851 = vunpack.c.h.b16 %v762
    %v852 = vunpack.c.l.b16 %v763
    %v853 = vunpack.c.h.b16 %v763
    %v854 = vunpack.c.l.b16 %v764
    %v855 = vunpack.c.h.b16 %v764
    %v856 = vunpack.c.l.b16 %v765
    %v857 = vunpack.c.h.b16 %v765
    %v858 = vunpack.c.l.b16 %v766
    %v859 = vunpack.c.h.b16 %v766
    %v860 = vunpack.c.l.b16 %v767
    %v861 = vunpack.c.h.b16 %v767
    %v862 = vunpack.c.l.b16 %v768
    %v863 = vunpack.c.h.b16 %v768
    %v864 = vunpack.c.l.b16 %v769
    %v865 = vunpack.c.h.b16 %v769
    %v866 = vpack.c.b16 %v804, %v802
    %v867 = vpack.c.b16 %v805, %v803
    %v868 = vpack.c.b16 %v808, %v806
    %v869 = vpack.c.b16 %v809, %v807
    %v870 = vpack.c.b16 %v812, %v810
    %v871 = vpack.c.b16 %v813, %v811
    %v872 = vpack.c.b16 %v816, %v814
    %v873 = vpack.c.b16 %v817, %v815
    %v874 = vpack.c.b16 %v820, %v818
    %v875 = vpack.c.b16 %v821, %v819
    %v876 = vpack.c.b16 %v824, %v822
    %v877 = vpack.c.b16 %v825, %v823
    %v878 = vpack.c.b16 %v828, %v826
    %v879 = vpack.c.b16 %v829, %v827
    %v880 = vpack.c.b16 %v832, %v830
    %v881 = vpack.c.b16 %v833, %v831
    %v882 = vpack.c.b16 %v836, %v834
    %v883 = vpack.c.b16 %v837, %v835
    %v884 = vpack.c.b16 %v840, %v838
    %v885 = vpack.c.b16 %v841, %v839
    %v886 = vpack.c.b16 %v844, %v842
    %v887 = vpack.c.b16 %v845, %v843
    %v888 = vpack.c.b16 %v848, %v846
    %v889 = vpack.c.b16 %v849, %v847
    %v890 = vpack.c.b16 %v852, %v850
    %v891 = vpack.c.b16 %v853, %v851
    %v892 = vpack.c.b16 %v856, %v854
    %v893 = vpack.c.b16 %v857, %v855
    %v894 = vpack.c.b16 %v860, %v858
    %v895 = vpack.c.b16 %v861, %v859
    %v896 = vpack.c.b16 %v864, %v862
    %v897 = vpack.c.b16 %v865, %v863
    %930 = vmatprep.subr.bf16.mxu0 %v867
    %931 = vmatpush1.bf16.msra.mxu0 %v866
    %932 = vmatprep.subr.bf16.mxu0 %v869
    %933 = vmatpush1.bf16.msra.mxu0 %v868
    %934 = vmatprep.subr.bf16.mxu0 %v871
    %935 = vmatpush1.bf16.msra.mxu0 %v870
    %936 = vmatprep.subr.bf16.mxu0 %v873
    %937 = vmatpush1.bf16.msra.mxu0 %v872
    %938 = vmatprep.subr.bf16.mxu0 %v875
    %939 = vmatpush1.bf16.msra.mxu0 %v874
    %940 = vmatprep.subr.bf16.mxu0 %v877
    %941 = vmatpush1.bf16.msra.mxu0 %v876
    %942 = vmatprep.subr.bf16.mxu0 %v879
    %943 = vmatpush1.bf16.msra.mxu0 %v878
    %944 = vmatprep.subr.bf16.mxu0 %v881
    %945 = vmatpush1.bf16.msra.mxu0 %v880
    %946 = vmatprep.subr.bf16.mxu0 %v883
    %947 = vmatpush1.bf16.msra.mxu0 %v882
    %948 = vmatprep.subr.bf16.mxu0 %v885
    %949 = vmatpush1.bf16.msra.mxu0 %v884
    %950 = vmatprep.subr.bf16.mxu0 %v887
    %951 = vmatpush1.bf16.msra.mxu0 %v886
    %952 = vmatprep.subr.bf16.mxu0 %v889
    %953 = vmatpush1.bf16.msra.mxu0 %v888
    %954 = vmatprep.subr.bf16.mxu0 %v891
    %955 = vmatpush1.bf16.msra.mxu0 %v890
    %956 = vmatprep.subr.bf16.mxu0 %v893
    %957 = vmatpush1.bf16.msra.mxu0 %v892
    %958 = vmatprep.subr.bf16.mxu0 %v895
    %959 = vmatpush1.bf16.msra.mxu0 %v894
    %960 = vmatprep.subr.bf16.mxu0 %v897
    %961 = vmatpush1.bf16.msra.mxu0 %v896
    %962 = vmatprep.mubr.bf16.mxu0 %v734
    %963 = vmatmul.mubr.bf16.gmra.mrb[0].mxu0 %v733
    %v964 = vpop.f32.mrb[0].mxu0
    %v965 = vadd.f32 0.0, %v964
    %v966 = vpop.f32.mrb[0].mxu0
    %v967 = vadd.f32 0.0, %v966
    %v968 = vpop.f32.mrb[0].mxu0
    %v969 = vadd.f32 0.0, %v968
    %v970 = vpop.f32.mrb[0].mxu0
    %v971 = vadd.f32 0.0, %v970
    %972 = vmatprep.mubr.bf16.mxu0 %v736
    %973 = vmatmul.mubr.bf16.gmra.mrb[0].mxu0 %v735
    %v974 = vpop.f32.mrb[0].mxu0
    %v975 = vadd.f32 0.0, %v974
    %v976 = vpop.f32.mrb[0].mxu0
    %v977 = vadd.f32 0.0, %v976
    %v978 = vpop.f32.mrb[0].mxu0
    %v979 = vadd.f32 0.0, %v978
    %v980 = vpop.f32.mrb[0].mxu0
    %v981 = vadd.f32 0.0, %v980
    %982 = vdwg.mxu0
    %v983 = vpack.c.bf16 %v969, %v965
    %v984 = vpack.c.bf16 %v971, %v967
    %v985 = vpack.c.bf16 %v979, %v975
    %v986 = vpack.c.bf16 %v981, %v977
    %s987 = scalar_lea.vmem %s3, 6
    %v988 = vld [vmem:[%s987] sm:$0x3]
    %v990 = vlaneseq
    %v991 = vshrl.u32 %v990, 7
    %v992 = vsub.s32 0, %v991
    %v993 = vrot.slane %v988, %v992
    %v994 = vlaneseq
    %v995 = vshrl.u32 %v994, 7
    %v996 = vsub.s32 1, %v995
    %v997 = vrot.slane %v988, %v996
    %v1000 = vpack.c.bf16 %v993, %v993
    %v1001 = vpack.c.bf16 %v997, %v997
    %v1003 = vpack.i.b16 %v1000, %v1000
    %v1005 = vlaneseq
    %v1006 = vshrl.u32 %v1005, 7
    %v1007 = vsub.s32 0, %v1006
    %v1008 = vrot.slane %v1003, %v1007
    %v1010 = vpack.i.b16 %v1001, %v1001
    %v1012 = vlaneseq
    %v1013 = vshrl.u32 %v1012, 7
    %v1014 = vsub.s32 0, %v1013
    %v1015 = vrot.slane %v1010, %v1014
    %v1016 = vadd.bf16 %v983, %v1008
    %v1017 = vadd.bf16 %v984, %v1015
    %v1018 = vadd.bf16 %v985, %v1008
    %v1019 = vadd.bf16 %v986, %v1015
    %v1020 = vmax.bf16 %v1016, 0
    %v1021 = vmax.bf16 %v1017, 0
    %v1022 = vmax.bf16 %v1018, 0
    %v1023 = vmax.bf16 %v1019, 0
    %v1028 = vunpack.c.l.b16 %v1020
    %v1029 = vunpack.c.l.b16 %v1021
    %v1030 = vunpack.c.h.b16 %v1020
    %v1031 = vunpack.c.h.b16 %v1021
    %v1032 = vunpack.c.l.b16 %v1022
    %v1033 = vunpack.c.l.b16 %v1023
    %v1034 = vunpack.c.h.b16 %v1022
    %v1035 = vunpack.c.h.b16 %v1023
    %v1036 = vpack.c.b16 %v1029, %v1028
    %v1037 = vpack.c.b16 %v1031, %v1030
    %v1038 = vpack.c.b16 %v1033, %v1032
    %v1039 = vpack.c.b16 %v1035, %v1034
    %1044 = vst [vmem:[#allocation5] sm:$0xff] %v1036
    %1045 = vst [vmem:[#allocation5 + $0x8] sm:$0xff] %v1037
    %1046 = vst [vmem:[#allocation5 + $0x10] sm:$0xff] %v1038
    %1047 = vst [vmem:[#allocation5 + $0x18] sm:$0xff] %v1039
    // Predicated region
    $region22: #{tpu_custom_call.1} parent=1 // pred_check
      _
    $region23: #{tpu_custom_call.1} parent=1 // pred_check_branch
      %1049 = sbr.rel (0) target = $region25
    $region24: #{tpu_custom_call.1} parent=1 // pred_region
      %s1051 = ssub.s32 512, 512
      %1052 = vsyncadd [#allocation4], %s1051
      %s1053 = sshll.u32 [#allocation5], 4
      %s1054 = int_to_ptr.vmem [resolvable:$true] %s1053
      %1059 = dma.vmem_to_hbm [thread:$0]  %s1054, 512, %s4, [#allocation4], 128, 128, 8
    $region25: #{tpu_custom_call.1} parent=1 // pred_fallthru
      _
    // Predicated region
    $region26: #{tpu_custom_call.1} parent=1 // pred_check
      _
    $region27: #{tpu_custom_call.1} parent=1 // pred_check_branch
      %1061 = sbr.rel (0) target = $region29
    $region28: #{tpu_custom_call.1} parent=1 // pred_region
      %1062 = dma.done [#allocation4], 512
    $region29: #{tpu_custom_call.1} parent=1 // pred_fallthru
      _
    %1063 = vsyncpa [#allocation3], 1
    %1064 = vsyncpa [#allocation4], 1

</llo_original>
